<compile_context>
chip_gen: v7x
topology: tpu7x:2x2x1
jax: 0.10.0
libtpu: 0.0.40
codegen_flags: <defaults>
</compile_context>

<pallas_src>
import math

import jax
import jax.numpy as jnp
import numpy as np
from jax.experimental import pallas as pl
from jax.experimental.pallas import tpu as pltpu

EMBED_DIM = 32
QDIM = KDIM = VDIM = 16
BATCH = 2
SEQ = 8


def _encoder_kernel(q_ref, k_ref, v_ref, w_ref, b_ref, pe_ref,
                    qo_ref, ko_ref, vo_ref):
    # q/k/v: (B*T, Din)       flattened inputs
    # w:     (3, Din, E)      stacked [Wq.T, Wk.T, Wv.T]
    # b:     (3, 1, E)        stacked biases
    # pe:    (B*T, E)         positional-encoding addend (tiled over batch)
    pe = pe_ref[...]

    qh = jnp.dot(q_ref[...], w_ref[0], preferred_element_type=jnp.float32)
    qh = jnp.maximum(qh + b_ref[0], 0.0)          # bias before ReLU
    qo_ref[...] = (qh + pe).astype(qo_ref.dtype)  # PE after activation

    kh = jnp.dot(k_ref[...], w_ref[1], preferred_element_type=jnp.float32)
    kh = jnp.maximum(kh + b_ref[1], 0.0)
    ko_ref[...] = (kh + pe).astype(ko_ref.dtype)

    vh = jnp.dot(v_ref[...], w_ref[2], preferred_element_type=jnp.float32)
    vh = jnp.maximum(vh + b_ref[2], 0.0)
    vo_ref[...] = vh.astype(vo_ref.dtype)         # no PE on value


def make_positional_encoding(seq_len: int, d_model: int) -> jnp.ndarray:
    # Standard sinusoidal PE (matches tsl PositionalEncoding table).
    position = np.arange(seq_len, dtype=np.float32)[:, None]
    div_term = np.exp(
        np.arange(0, d_model, 2, dtype=np.float32) * -(math.log(10000.0) / d_model)
    )
    pe = np.zeros((seq_len, d_model), dtype=np.float32)
    pe[:, 0::2] = np.sin(position * div_term)
    pe[:, 1::2] = np.cos(position * div_term)
    return jnp.asarray(pe)


def prepare_fused_params(params, pe_table, batch):
    """One-time parameter prep (hoisted out of the per-call hot path).

    PyTorch Linear stores W as (out, in); the kernel consumes the stacked,
    transposed (3, Din, E) layout.  Requires qdim == kdim == vdim (true for
    this instantiation).
    """
    w_stack = jnp.stack(
        [params["wq"].T, params["wk"].T, params["wv"].T])           # (3, Din, E)
    b_stack = jnp.stack(
        [params["bq"], params["bk"], params["bv"]])[:, None, :]     # (3, 1, E)
    pe_addend = jnp.tile(pe_table, (batch, 1))                      # (B*T, E)
    return w_stack, b_stack, pe_addend


@jax.jit
def attention_encoder(q, k, v, w_stack, b_stack, pe_addend):
    B, T, _ = q.shape
    E = w_stack.shape[-1]
    BT = B * T

    # (B,T,D) -> (B*T,D) reshapes are free (no copy, no extra launch).
    q2 = q.reshape(BT, -1)
    k2 = k.reshape(BT, -1)
    v2 = v.reshape(BT, -1)

    flops = 2 * BT * (q2.shape[-1] + k2.shape[-1] + v2.shape[-1]) * E
    bytes_accessed = 4 * (q2.size + k2.size + v2.size + w_stack.size
                          + b_stack.size + pe_addend.size + 3 * BT * E)

    vmem = pl.BlockSpec(memory_space=pltpu.MemorySpace.VMEM)
    out_sds = jax.ShapeDtypeStruct((BT, E), q.dtype)

    qo, ko, vo = pl.pallas_call(
        _encoder_kernel,
        out_shape=(out_sds, out_sds, out_sds),
        in_specs=[vmem] * 6,
        out_specs=(vmem, vmem, vmem),
        cost_estimate=pl.CostEstimate(
            flops=flops, transcendentals=0, bytes_accessed=bytes_accessed),
    )(q2, k2, v2, w_stack, b_stack, pe_addend)

    return (qo.reshape(B, T, E),
            ko.reshape(B, T, E),
            vo.reshape(B, T, E))


def reference(q, k, v, params, pe_table):
    def proj(x, w, b):
        return jnp.maximum(jnp.einsum("btd,ed->bte", x, w) + b, 0.0)

    q_h = proj(q, params["wq"], params["bq"]) + pe_table[None]
    k_h = proj(k, params["wk"], params["bk"]) + pe_table[None]
    v_h = proj(v, params["wv"], params["bv"])
    return q_h, k_h, v_h


if __name__ == "__main__":
    key = jax.random.PRNGKey(0)
    keys = jax.random.split(key, 9)

    # Deterministic parameter init (PyTorch Linear layout: W is (out, in)).
    params = {
        "wq": jax.random.normal(keys[0], (EMBED_DIM, QDIM), jnp.float32) * 0.1,
        "wk": jax.random.normal(keys[1], (EMBED_DIM, KDIM), jnp.float32) * 0.1,
        "wv": jax.random.normal(keys[2], (EMBED_DIM, VDIM), jnp.float32) * 0.1,
        "bq": jax.random.normal(keys[3], (EMBED_DIM,), jnp.float32) * 0.1,
        "bk": jax.random.normal(keys[4], (EMBED_DIM,), jnp.float32) * 0.1,
        "bv": jax.random.normal(keys[5], (EMBED_DIM,), jnp.float32) * 0.1,
    }

    q = jax.random.normal(keys[6], (BATCH, SEQ, QDIM), jnp.float32)
    k = jax.random.normal(keys[7], (BATCH, SEQ, KDIM), jnp.float32)
    v = jax.random.normal(keys[8], (BATCH, SEQ, VDIM), jnp.float32)

    pe_table = make_positional_encoding(SEQ, EMBED_DIM)

    # One-time stacked-parameter prep (not part of the per-call hot path).
    w_stack, b_stack, pe_addend = prepare_fused_params(params, pe_table, BATCH)
    w_stack, b_stack, pe_addend = jax.block_until_ready(
        (w_stack, b_stack, pe_addend))

    outs = attention_encoder(q, k, v, w_stack, b_stack, pe_addend)
    outs = jax.block_until_ready(outs)

    refs = reference(q, k, v, params, pe_table)
    for o, r in zip(outs, refs):
        np.testing.assert_allclose(np.asarray(o), np.asarray(r), rtol=1e-5, atol=1e-5)

    print("KERNEL_OK")
</pallas_src>

<mosaic_0001>
module attributes {stable_mosaic.version = 11 : i64} {
  func.func @_encoder_kernel(%arg0: memref<16x16xf32, #tpu.memory_space<vmem>>, %arg1: memref<16x16xf32, #tpu.memory_space<vmem>>, %arg2: memref<16x16xf32, #tpu.memory_space<vmem>>, %arg3: memref<3x16x32xf32, #tpu.memory_space<vmem>>, %arg4: memref<3x1x32xf32, #tpu.memory_space<vmem>>, %arg5: memref<16x32xf32, #tpu.memory_space<vmem>>, %arg6: memref<16x32xf32, #tpu.memory_space<vmem>>, %arg7: memref<16x32xf32, #tpu.memory_space<vmem>>, %arg8: memref<16x32xf32, #tpu.memory_space<vmem>>) attributes {dimension_semantics = [], scalar_prefetch = 0 : i64, scratch_operands = 0 : i64, tpu.core_type = #tpu.core_type<tc>} {
    %c0 = arith.constant 0 : index
    %c0_0 = arith.constant 0 : index
    %0 = vector.load %arg5[%c0, %c0_0] : memref<16x32xf32, #tpu.memory_space<vmem>>, vector<16x32xf32>
    %c0_1 = arith.constant 0 : index
    %c0_2 = arith.constant 0 : index
    %1 = vector.load %arg0[%c0_1, %c0_2] : memref<16x16xf32, #tpu.memory_space<vmem>>, vector<16x16xf32>
    %c0_3 = arith.constant 0 : index
    %c0_4 = arith.constant 0 : index
    %c0_5 = arith.constant 0 : index
    %2 = vector.load %arg3[%c0_3, %c0_4, %c0_5] : memref<3x16x32xf32, #tpu.memory_space<vmem>>, vector<1x16x32xf32>
    %3 = vector.shape_cast %2 : vector<1x16x32xf32> to vector<16x32xf32>
    %cst = arith.constant dense<0.000000e+00> : vector<16x32xf32>
    %4 = tpu.matmul %1, %3, %cst {dimension_numbers = #tpu.dot_dimension_numbers<[1], [0], [0], [1], [0, 0, 1, 1], [], []>} : vector<16x16xf32>, vector<16x32xf32>, vector<16x32xf32> -> vector<16x32xf32>
    %c0_6 = arith.constant 0 : index
    %c0_7 = arith.constant 0 : index
    %c0_8 = arith.constant 0 : index
    %5 = vector.load %arg4[%c0_6, %c0_7, %c0_8] : memref<3x1x32xf32, #tpu.memory_space<vmem>>, vector<1x1x32xf32>
    %6 = vector.shape_cast %5 : vector<1x1x32xf32> to vector<1x32xf32>
    %7 = vector.broadcast %6 : vector<1x32xf32> to vector<16x32xf32>
    %8 = arith.addf %4, %7 : vector<16x32xf32>
    %cst_9 = arith.constant 0.000000e+00 : f32
    %9 = vector.broadcast %cst_9 : f32 to vector<16x32xf32>
    %10 = arith.maximumf %8, %9 : vector<16x32xf32>
    %11 = arith.addf %10, %0 : vector<16x32xf32>
    %c0_10 = arith.constant 0 : index
    %c0_11 = arith.constant 0 : index
    %12 = vector.load %arg6[%c0_10, %c0_11] : memref<16x32xf32, #tpu.memory_space<vmem>>, vector<16x32xf32>
    tpu.vector_store %arg6[%c0_10, %c0_11], %11 {strides = array<i32>} : memref<16x32xf32, #tpu.memory_space<vmem>>, vector<16x32xf32>,
    %c0_12 = arith.constant 0 : index
    %c0_13 = arith.constant 0 : index
    %13 = vector.load %arg1[%c0_12, %c0_13] : memref<16x16xf32, #tpu.memory_space<vmem>>, vector<16x16xf32>
    %c1 = arith.constant 1 : index
    %c0_14 = arith.constant 0 : index
    %c0_15 = arith.constant 0 : index
    %14 = vector.load %arg3[%c1, %c0_14, %c0_15] : memref<3x16x32xf32, #tpu.memory_space<vmem>>, vector<1x16x32xf32>
    %15 = vector.shape_cast %14 : vector<1x16x32xf32> to vector<16x32xf32>
    %cst_16 = arith.constant dense<0.000000e+00> : vector<16x32xf32>
    %16 = tpu.matmul %13, %15, %cst_16 {dimension_numbers = #tpu.dot_dimension_numbers<[1], [0], [0], [1], [0, 0, 1, 1], [], []>} : vector<16x16xf32>, vector<16x32xf32>, vector<16x32xf32> -> vector<16x32xf32>
    %c1_17 = arith.constant 1 : index
    %c0_18 = arith.constant 0 : index
    %c0_19 = arith.constant 0 : index
    %17 = vector.load %arg4[%c1_17, %c0_18, %c0_19] : memref<3x1x32xf32, #tpu.memory_space<vmem>>, vector<1x1x32xf32>
    %18 = vector.shape_cast %17 : vector<1x1x32xf32> to vector<1x32xf32>
    %19 = vector.broadcast %18 : vector<1x32xf32> to vector<16x32xf32>
    %20 = arith.addf %16, %19 : vector<16x32xf32>
    %cst_20 = arith.constant 0.000000e+00 : f32
    %21 = vector.broadcast %cst_20 : f32 to vector<16x32xf32>
    %22 = arith.maximumf %20, %21 : vector<16x32xf32>
    %23 = arith.addf %22, %0 : vector<16x32xf32>
    %c0_21 = arith.constant 0 : index
    %c0_22 = arith.constant 0 : index
    %24 = vector.load %arg7[%c0_21, %c0_22] : memref<16x32xf32, #tpu.memory_space<vmem>>, vector<16x32xf32>
    tpu.vector_store %arg7[%c0_21, %c0_22], %23 {strides = array<i32>} : memref<16x32xf32, #tpu.memory_space<vmem>>, vector<16x32xf32>,
    %c0_23 = arith.constant 0 : index
    %c0_24 = arith.constant 0 : index
    %25 = vector.load %arg2[%c0_23, %c0_24] : memref<16x16xf32, #tpu.memory_space<vmem>>, vector<16x16xf32>
    %c2 = arith.constant 2 : index
    %c0_25 = arith.constant 0 : index
    %c0_26 = arith.constant 0 : index
    %26 = vector.load %arg3[%c2, %c0_25, %c0_26] : memref<3x16x32xf32, #tpu.memory_space<vmem>>, vector<1x16x32xf32>
    %27 = vector.shape_cast %26 : vector<1x16x32xf32> to vector<16x32xf32>
    %cst_27 = arith.constant dense<0.000000e+00> : vector<16x32xf32>
    %28 = tpu.matmul %25, %27, %cst_27 {dimension_numbers = #tpu.dot_dimension_numbers<[1], [0], [0], [1], [0, 0, 1, 1], [], []>} : vector<16x16xf32>, vector<16x32xf32>, vector<16x32xf32> -> vector<16x32xf32>
    %c2_28 = arith.constant 2 : index
    %c0_29 = arith.constant 0 : index
    %c0_30 = arith.constant 0 : index
    %29 = vector.load %arg4[%c2_28, %c0_29, %c0_30] : memref<3x1x32xf32, #tpu.memory_space<vmem>>, vector<1x1x32xf32>
    %30 = vector.shape_cast %29 : vector<1x1x32xf32> to vector<1x32xf32>
    %31 = vector.broadcast %30 : vector<1x32xf32> to vector<16x32xf32>
    %32 = arith.addf %28, %31 : vector<16x32xf32>
    %cst_31 = arith.constant 0.000000e+00 : f32
    %33 = vector.broadcast %cst_31 : f32 to vector<16x32xf32>
    %34 = arith.maximumf %32, %33 : vector<16x32xf32>
    %c0_32 = arith.constant 0 : index
    %c0_33 = arith.constant 0 : index
    %35 = vector.load %arg8[%c0_32, %c0_33] : memref<16x32xf32, #tpu.memory_space<vmem>>, vector<16x32xf32>
    tpu.vector_store %arg8[%c0_32, %c0_33], %34 {strides = array<i32>} : memref<16x32xf32, #tpu.memory_space<vmem>>, vector<16x32xf32>,
    return
  }
}

</mosaic_0001>

<llo_original>
// kernel: attention_encoder.1
$region0: #{attention_encoder.1}
  #allocation0 [shape = 'u32[]', space=smem, size = 0x4, offset = 0x4, fixed_abs, tag = 'smem constant byte address 0x4 - core index']
  #allocation1 [shape = 'u32[144,128]{1,0:T(1,128)}', space=vmem, size = 0x12000, scoped, tag = 'internal scratch']
  %s0 = inlined_call_operand.hbm [shape: f32[16,16], index: 0, kind: input, shape index: {}]
  %s1 = inlined_call_operand.hbm [shape: f32[16,16], index: 1, kind: input, shape index: {}]
  %s2 = inlined_call_operand.vmem [shape: f32[16,16], index: 2, kind: input, shape index: {}]
  %s3 = inlined_call_operand.hbm [shape: f32[3,16,32], index: 3, kind: input, shape index: {}]
  %s4 = inlined_call_operand.vmem [shape: f32[3,1,32], index: 4, kind: input, shape index: {}]
  %s5 = inlined_call_operand.hbm [shape: f32[16,32], index: 5, kind: input, shape index: {}]
  %s6 = inlined_call_operand.hbm [shape: f32[16,32], index: 6, kind: output, shape index: {0}]
  %s7 = inlined_call_operand.hbm [shape: f32[16,32], index: 7, kind: output, shape index: {1}]
  %s8 = inlined_call_operand.hbm [shape: f32[16,32], index: 8, kind: output, shape index: {2}]
  %9 = xla_tuple %s6, %s7, %s8
  %s10 = sld [smem:[#allocation0]]
  $region66: #{attention_encoder.1} parent=0
    _
  %s12 = ssub.s32 1, %s10
  %s13 = scalar_select 0, %s12, %s10
  $region1: #{attention_encoder.1} parent=0
    #allocation2 [shape = 'u8[8192]{0}', space=vmem, size = 0x2000, scoped, tag = 'input window, operand 0, single buffered']
    #allocation3 [shape = 's32[1]{0}', space=sflag, size = 0x4, scoped, tag = 'scoped memory for attention_encoder.1']
    #allocation4 [shape = 's32[1]{0}', space=sflag, size = 0x4, scoped, tag = 'scoped memory for attention_encoder.1']
    #allocation5 [shape = 'u8[8192]{0}', space=vmem, size = 0x2000, scoped, tag = 'input window, operand 1, single buffered']
    #allocation6 [shape = 's32[1]{0}', space=sflag, size = 0x4, scoped, tag = 'scoped memory for attention_encoder.1']
    #allocation7 [shape = 'u8[24576]{0}', space=vmem, size = 0x6000, scoped, tag = 'input window, operand 3, single buffered']
    #allocation8 [shape = 'u8[8192]{0}', space=vmem, size = 0x2000, scoped, tag = 'input window, operand 5, single buffered']
    #allocation9 [shape = 's32[1]{0}', space=sflag, size = 0x4, scoped, tag = 'scoped memory for attention_encoder.1']
    #allocation10 [shape = 'u8[8192]{0}', space=vmem, size = 0x2000, scoped, tag = 'output window, operand 0, single buffered']
    #allocation11 [shape = 'u8[8192]{0}', space=vmem, size = 0x2000, scoped, tag = 'output window, operand 1, single buffered']
    #allocation12 [shape = 's32[1]{0}', space=sflag, size = 0x4, scoped, tag = 'scoped memory for attention_encoder.1']
    #allocation13 [shape = 'u8[8192]{0}', space=vmem, size = 0x2000, scoped, tag = 'output window, operand 2, single buffered']
    %14 = vsyncpa [#allocation3], 0
    %15 = vsyncpa [#allocation6], 0
    %16 = vsyncpa [#allocation9], 0
    %17 = vsyncpa [#allocation4], 0
    %18 = vsyncpa [#allocation12], 0
    // Predicated region
    $region2: #{attention_encoder.1} parent=1 // pred_check
      _
    $region3: #{attention_encoder.1} parent=1 // pred_check_branch
      %20 = sbr.rel (0) target = $region5
    $region4: #{attention_encoder.1} parent=1 // pred_region
      %s22 = ssub.s32 256, 256
      %23 = vsyncadd [#allocation3], %s22
      %s24 = sshll.u32 [#allocation2], 4
      %s25 = int_to_ptr.vmem [resolvable:$true] %s24
      %30 = dma.hbm_to_vmem [thread:$0]  %s0, 256, %s25, [#allocation3], 128, 128, 8
    $region5: #{attention_encoder.1} parent=1 // pred_fallthru
      _
    // Predicated region
    $region6: #{attention_encoder.1} parent=1 // pred_check
      _
    $region7: #{attention_encoder.1} parent=1 // pred_check_branch
      %32 = sbr.rel (0) target = $region9
    $region8: #{attention_encoder.1} parent=1 // pred_region
      %s34 = ssub.s32 256, 256
      %35 = vsyncadd [#allocation6], %s34
      %s36 = sshll.u32 [#allocation5], 4
      %s37 = int_to_ptr.vmem [resolvable:$true] %s36
      %42 = dma.hbm_to_vmem [thread:$0]  %s1, 256, %s37, [#allocation6], 128, 128, 8
    $region9: #{attention_encoder.1} parent=1 // pred_fallthru
      _
    // Predicated region
    $region10: #{attention_encoder.1} parent=1 // pred_check
      _
    $region11: #{attention_encoder.1} parent=1 // pred_check_branch
      %44 = sbr.rel (0) target = $region13
    $region12: #{attention_encoder.1} parent=1 // pred_region
      _
    $region13: #{attention_encoder.1} parent=1 // pred_fallthru
      _
    // Predicated region
    $region14: #{attention_encoder.1} parent=1 // pred_check
      _
    $region15: #{attention_encoder.1} parent=1 // pred_check_branch
      %46 = sbr.rel (0) target = $region17
    $region16: #{attention_encoder.1} parent=1 // pred_region
      %s48 = ssub.s32 768, 768
      %49 = vsyncadd [#allocation6], %s48
      %s50 = sshll.u32 [#allocation7], 4
      %s51 = int_to_ptr.vmem [resolvable:$true] %s50
      %56 = dma.hbm_to_vmem [thread:$0]  %s3, 768, %s51, [#allocation6], 128, 128, 8
    $region17: #{attention_encoder.1} parent=1 // pred_fallthru
      _
    // Predicated region
    $region18: #{attention_encoder.1} parent=1 // pred_check
      _
    $region19: #{attention_encoder.1} parent=1 // pred_check_branch
      %58 = sbr.rel (0) target = $region21
    $region20: #{attention_encoder.1} parent=1 // pred_region
      _
    $region21: #{attention_encoder.1} parent=1 // pred_fallthru
      _
    // Predicated region
    $region22: #{attention_encoder.1} parent=1 // pred_check
      _
    $region23: #{attention_encoder.1} parent=1 // pred_check_branch
      %60 = sbr.rel (0) target = $region25
    $region24: #{attention_encoder.1} parent=1 // pred_region
      %s62 = ssub.s32 256, 256
      %63 = vsyncadd [#allocation9], %s62
      %s64 = sshll.u32 [#allocation8], 4
      %s65 = int_to_ptr.vmem [resolvable:$true] %s64
      %70 = dma.hbm_to_vmem [thread:$0]  %s5, 256, %s65, [#allocation9], 128, 128, 8
    $region25: #{attention_encoder.1} parent=1 // pred_fallthru
      _
    // Predicated region
    $region26: #{attention_encoder.1} parent=1 // pred_check
      _
    $region27: #{attention_encoder.1} parent=1 // pred_check_branch
      %72 = sbr.rel (0) target = $region29
    $region28: #{attention_encoder.1} parent=1 // pred_region
      %73 = dma.done [#allocation3], 256
    $region29: #{attention_encoder.1} parent=1 // pred_fallthru
      _
    // Predicated region
    $region30: #{attention_encoder.1} parent=1 // pred_check
      _
    $region31: #{attention_encoder.1} parent=1 // pred_check_branch
      %75 = sbr.rel (0) target = $region33
    $region32: #{attention_encoder.1} parent=1 // pred_region
      %76 = dma.done [#allocation6], 256
    $region33: #{attention_encoder.1} parent=1 // pred_fallthru
      _
    // Predicated region
    $region34: #{attention_encoder.1} parent=1 // pred_check
      _
    $region35: #{attention_encoder.1} parent=1 // pred_check_branch
      %78 = sbr.rel (0) target = $region37
    $region36: #{attention_encoder.1} parent=1 // pred_region
      %79 = dma.done [#allocation6], 768
    $region37: #{attention_encoder.1} parent=1 // pred_fallthru
      _
    // Predicated region
    $region38: #{attention_encoder.1} parent=1 // pred_check
      _
    $region39: #{attention_encoder.1} parent=1 // pred_check_branch
      %81 = sbr.rel (0) target = $region41
    $region40: #{attention_encoder.1} parent=1 // pred_region
      %82 = dma.done [#allocation9], 256
    $region41: #{attention_encoder.1} parent=1 // pred_fallthru
      _
    %v83 = vld [vmem:[#allocation8] sm:$0xff]
    %v84 = vld [vmem:[#allocation8 + $0x8] sm:$0xff]
    %v85 = vld [vmem:[#allocation2] sm:$0xff]
    %v86 = vld [vmem:[#allocation2 + $0x8] sm:$0xff]
    %v87 = vld [vmem:[#allocation7] sm:$0xff]
    %v88 = vld [vmem:[#allocation7 + $0x8] sm:$0xff]
    %v89 = vld [vmem:[%s4] sm:$0x1]
    %v91 = vlaneseq
    %v92 = vshrl.u32 %v91, 7
    %v93 = vsub.s32 0, %v92
    %v94 = vrot.slane %v89, %v93
    %vm96 = vcmask 130048
    %v98 = vsel %vm96, %v85, 0
    %v101 = vsel %vm96, %v86, 0
    %103 = vmatprep.subr.mxu0 0.0
    %104 = vmatpush1.msra.mxu0 %v87
    %105 = vmatprep.subr.mxu0 0.0
    %106 = vmatpush1.msra.mxu0 %v88
    %107 = vmatprep.subr.mxu0 0.0
    %108 = vmatpush1.msra.mxu0 0.0
    %109 = vmatprep.subr.mxu0 0.0
    %110 = vmatpush1.msra.mxu0 0.0
    %111 = vmatprep.subr.mxu0 0.0
    %112 = vmatpush1.msra.mxu0 0.0
    %113 = vmatprep.subr.mxu0 0.0
    %114 = vmatpush1.msra.mxu0 0.0
    %115 = vmatprep.subr.mxu0 0.0
    %116 = vmatpush1.msra.mxu0 0.0
    %117 = vmatprep.subr.mxu0 0.0
    %118 = vmatpush1.msra.mxu0 0.0
    %119 = vmatprep.subr.mxu0 0.0
    %120 = vmatpush1.msra.mxu0 0.0
    %121 = vmatprep.subr.mxu0 0.0
    %122 = vmatpush1.msra.mxu0 0.0
    %123 = vmatprep.subr.mxu0 0.0
    %124 = vmatpush1.msra.mxu0 0.0
    %125 = vmatprep.subr.mxu0 0.0
    %126 = vmatpush1.msra.mxu0 0.0
    %127 = vmatprep.subr.mxu0 0.0
    %128 = vmatpush1.msra.mxu0 0.0
    %129 = vmatprep.subr.mxu0 0.0
    %130 = vmatpush1.msra.mxu0 0.0
    %131 = vmatprep.subr.mxu0 0.0
    %132 = vmatpush1.msra.mxu0 0.0
    %133 = vmatprep.subr.mxu0 0.0
    %134 = vmatpush1.msra.mxu0 0.0
    %135 = vmatprep.subr.mxu0 0.0
    %136 = vmatpush1.msra.mxu0 0.0
    %137 = vmatprep.subr.mxu0 0.0
    %138 = vmatpush1.msra.mxu0 0.0
    %139 = vmatprep.subr.mxu0 0.0
    %140 = vmatpush1.msra.mxu0 0.0
    %141 = vmatprep.subr.mxu0 0.0
    %142 = vmatpush1.msra.mxu0 0.0
    %143 = vmatprep.subr.mxu0 0.0
    %144 = vmatpush1.msra.mxu0 0.0
    %145 = vmatprep.subr.mxu0 0.0
    %146 = vmatpush1.msra.mxu0 0.0
    %147 = vmatprep.subr.mxu0 0.0
    %148 = vmatpush1.msra.mxu0 0.0
    %149 = vmatprep.subr.mxu0 0.0
    %150 = vmatpush1.msra.mxu0 0.0
    %151 = vmatprep.subr.mxu0 0.0
    %152 = vmatpush1.msra.mxu0 0.0
    %153 = vmatprep.subr.mxu0 0.0
    %154 = vmatpush1.msra.mxu0 0.0
    %155 = vmatprep.subr.mxu0 0.0
    %156 = vmatpush1.msra.mxu0 0.0
    %157 = vmatprep.subr.mxu0 0.0
    %158 = vmatpush1.msra.mxu0 0.0
    %159 = vmatprep.subr.mxu0 0.0
    %160 = vmatpush1.msra.mxu0 0.0
    %161 = vmatprep.subr.mxu0 0.0
    %162 = vmatpush1.msra.mxu0 0.0
    %163 = vmatprep.subr.mxu0 0.0
    %164 = vmatpush1.msra.mxu0 0.0
    %165 = vmatprep.subr.mxu0 0.0
    %166 = vmatpush1.msra.mxu0 0.0
    %167 = vmatprep.mubr.f32.mxu0 0.0
    %168 = vmatmul.mubr.f32.gmra.mrb[0].mxu0 %v98
    %v169 = vpop.f32.mrb[0].mxu0
    %v170 = vadd.f32 %v94, %v169
    %v171 = vpop.f32.mrb[0].mxu0
    %172 = vmatprep.mubr.f32.mxu0 0.0
    %173 = vmatmul.mubr.f32.gmra.mrb[0].mxu0 %v101
    %v174 = vpop.f32.mrb[0].mxu0
    %v175 = vadd.f32 %v94, %v174
    %v176 = vpop.f32.mrb[0].mxu0
    %177 = vdwg.mxu0
    %v178 = vmax.f32 %v170, 0.0
    %v179 = vmax.f32 %v175, 0.0
    %v180 = vadd.f32 %v178, %v83
    %v181 = vadd.f32 %v179, %v84
    %vm182 = vcmask 261120
    %183 = vst.msk [vmem:[#allocation10] sm:$0xff] %vm182, %v180
    %184 = vst.msk [vmem:[#allocation10 + $0x8] sm:$0xff] %vm182, %v181
    %v185 = vld [vmem:[#allocation5] sm:$0xff]
    %v186 = vld [vmem:[#allocation5 + $0x8] sm:$0xff]
    %s187 = scalar_lea.vmem [#allocation7], 16
    %v188 = vld [vmem:[%s187] sm:$0xff]
    %v189 = vld [vmem:[%s187 + $0x8] sm:$0xff]
    %s190 = scalar_lea.vmem %s4, 1
    %v191 = vld [vmem:[%s190] sm:$0x1]
    %v193 = vlaneseq
    %v194 = vshrl.u32 %v193, 7
    %v195 = vsub.s32 0, %v194
    %v196 = vrot.slane %v191, %v195
    %v199 = vsel %vm96, %v185, 0
    %v202 = vsel %vm96, %v186, 0
    %204 = vmatprep.subr.mxu0 0.0
    %205 = vmatpush1.msra.mxu0 %v188
    %206 = vmatprep.subr.mxu0 0.0
    %207 = vmatpush1.msra.mxu0 %v189
    %208 = vmatprep.subr.mxu0 0.0
    %209 = vmatpush1.msra.mxu0 0.0
    %210 = vmatprep.subr.mxu0 0.0
    %211 = vmatpush1.msra.mxu0 0.0
    %212 = vmatprep.subr.mxu0 0.0
    %213 = vmatpush1.msra.mxu0 0.0
    %214 = vmatprep.subr.mxu0 0.0
    %215 = vmatpush1.msra.mxu0 0.0
    %216 = vmatprep.subr.mxu0 0.0
    %217 = vmatpush1.msra.mxu0 0.0
    %218 = vmatprep.subr.mxu0 0.0
    %219 = vmatpush1.msra.mxu0 0.0
    %220 = vmatprep.subr.mxu0 0.0
    %221 = vmatpush1.msra.mxu0 0.0
    %222 = vmatprep.subr.mxu0 0.0
    %223 = vmatpush1.msra.mxu0 0.0
    %224 = vmatprep.subr.mxu0 0.0
    %225 = vmatpush1.msra.mxu0 0.0
    %226 = vmatprep.subr.mxu0 0.0
    %227 = vmatpush1.msra.mxu0 0.0
    %228 = vmatprep.subr.mxu0 0.0
    %229 = vmatpush1.msra.mxu0 0.0
    %230 = vmatprep.subr.mxu0 0.0
    %231 = vmatpush1.msra.mxu0 0.0
    %232 = vmatprep.subr.mxu0 0.0
    %233 = vmatpush1.msra.mxu0 0.0
    %234 = vmatprep.subr.mxu0 0.0
    %235 = vmatpush1.msra.mxu0 0.0
    %236 = vmatprep.subr.mxu0 0.0
    %237 = vmatpush1.msra.mxu0 0.0
    %238 = vmatprep.subr.mxu0 0.0
    %239 = vmatpush1.msra.mxu0 0.0
    %240 = vmatprep.subr.mxu0 0.0
    %241 = vmatpush1.msra.mxu0 0.0
    %242 = vmatprep.subr.mxu0 0.0
    %243 = vmatpush1.msra.mxu0 0.0
    %244 = vmatprep.subr.mxu0 0.0
    %245 = vmatpush1.msra.mxu0 0.0
    %246 = vmatprep.subr.mxu0 0.0
    %247 = vmatpush1.msra.mxu0 0.0
    %248 = vmatprep.subr.mxu0 0.0
    %249 = vmatpush1.msra.mxu0 0.0
    %250 = vmatprep.subr.mxu0 0.0
    %251 = vmatpush1.msra.mxu0 0.0
    %252 = vmatprep.subr.mxu0 0.0
    %253 = vmatpush1.msra.mxu0 0.0
    %254 = vmatprep.subr.mxu0 0.0
    %255 = vmatpush1.msra.mxu0 0.0
    %256 = vmatprep.subr.mxu0 0.0
    %257 = vmatpush1.msra.mxu0 0.0
    %258 = vmatprep.subr.mxu0 0.0
    %259 = vmatpush1.msra.mxu0 0.0
    %260 = vmatprep.subr.mxu0 0.0
    %261 = vmatpush1.msra.mxu0 0.0
    %262 = vmatprep.subr.mxu0 0.0
    %263 = vmatpush1.msra.mxu0 0.0
    %264 = vmatprep.subr.mxu0 0.0
    %265 = vmatpush1.msra.mxu0 0.0
    %266 = vmatprep.subr.mxu0 0.0
    %267 = vmatpush1.msra.mxu0 0.0
    %268 = vmatprep.mubr.f32.mxu0 0.0
    %269 = vmatmul.mubr.f32.gmra.mrb[0].mxu0 %v199
    %v270 = vpop.f32.mrb[0].mxu0
    %v271 = vadd.f32 %v196, %v270
    %v272 = vpop.f32.mrb[0].mxu0
    %273 = vmatprep.mubr.f32.mxu0 0.0
    %274 = vmatmul.mubr.f32.gmra.mrb[0].mxu0 %v202
    %v275 = vpop.f32.mrb[0].mxu0
    %v276 = vadd.f32 %v196, %v275
    %v277 = vpop.f32.mrb[0].mxu0
    %278 = vdwg.mxu0
    %v279 = vmax.f32 %v271, 0.0
    %v280 = vmax.f32 %v276, 0.0
    %v281 = vadd.f32 %v279, %v83
    %v282 = vadd.f32 %v280, %v84
    %283 = vst.msk [vmem:[#allocation11] sm:$0xff] %vm182, %v281
    %284 = vst.msk [vmem:[#allocation11 + $0x8] sm:$0xff] %vm182, %v282
    %v285 = vld [vmem:[%s2] sm:$0xff]
    %v286 = vld [vmem:[%s2 + $0x8] sm:$0xff]
    %s287 = scalar_lea.vmem [#allocation7], 32
    %v288 = vld [vmem:[%s287] sm:$0xff]
    %v289 = vld [vmem:[%s287 + $0x8] sm:$0xff]
    %s290 = scalar_lea.vmem %s4, 2
    %v291 = vld [vmem:[%s290] sm:$0x1]
    %v293 = vlaneseq
    %v294 = vshrl.u32 %v293, 7
    %v295 = vsub.s32 0, %v294
    %v296 = vrot.slane %v291, %v295
    %v299 = vsel %vm96, %v285, 0
    %v302 = vsel %vm96, %v286, 0
    %304 = vmatprep.subr.mxu0 0.0
    %305 = vmatpush1.msra.mxu0 %v288
    %306 = vmatprep.subr.mxu0 0.0
    %307 = vmatpush1.msra.mxu0 %v289
    %308 = vmatprep.subr.mxu0 0.0
    %309 = vmatpush1.msra.mxu0 0.0
    %310 = vmatprep.subr.mxu0 0.0
    %311 = vmatpush1.msra.mxu0 0.0
    %312 = vmatprep.subr.mxu0 0.0
    %313 = vmatpush1.msra.mxu0 0.0
    %314 = vmatprep.subr.mxu0 0.0
    %315 = vmatpush1.msra.mxu0 0.0
    %316 = vmatprep.subr.mxu0 0.0
    %317 = vmatpush1.msra.mxu0 0.0
    %318 = vmatprep.subr.mxu0 0.0
    %319 = vmatpush1.msra.mxu0 0.0
    %320 = vmatprep.subr.mxu0 0.0
    %321 = vmatpush1.msra.mxu0 0.0
    %322 = vmatprep.subr.mxu0 0.0
    %323 = vmatpush1.msra.mxu0 0.0
    %324 = vmatprep.subr.mxu0 0.0
    %325 = vmatpush1.msra.mxu0 0.0
    %326 = vmatprep.subr.mxu0 0.0
    %327 = vmatpush1.msra.mxu0 0.0
    %328 = vmatprep.subr.mxu0 0.0
    %329 = vmatpush1.msra.mxu0 0.0
    %330 = vmatprep.subr.mxu0 0.0
    %331 = vmatpush1.msra.mxu0 0.0
    %332 = vmatprep.subr.mxu0 0.0
    %333 = vmatpush1.msra.mxu0 0.0
    %334 = vmatprep.subr.mxu0 0.0
    %335 = vmatpush1.msra.mxu0 0.0
    %336 = vmatprep.subr.mxu0 0.0
    %337 = vmatpush1.msra.mxu0 0.0
    %338 = vmatprep.subr.mxu0 0.0
    %339 = vmatpush1.msra.mxu0 0.0
    %340 = vmatprep.subr.mxu0 0.0
    %341 = vmatpush1.msra.mxu0 0.0
    %342 = vmatprep.subr.mxu0 0.0
    %343 = vmatpush1.msra.mxu0 0.0
    %344 = vmatprep.subr.mxu0 0.0
    %345 = vmatpush1.msra.mxu0 0.0
    %346 = vmatprep.subr.mxu0 0.0
    %347 = vmatpush1.msra.mxu0 0.0
    %348 = vmatprep.subr.mxu0 0.0
    %349 = vmatpush1.msra.mxu0 0.0
    %350 = vmatprep.subr.mxu0 0.0
    %351 = vmatpush1.msra.mxu0 0.0
    %352 = vmatprep.subr.mxu0 0.0
    %353 = vmatpush1.msra.mxu0 0.0
    %354 = vmatprep.subr.mxu0 0.0
    %355 = vmatpush1.msra.mxu0 0.0
    %356 = vmatprep.subr.mxu0 0.0
    %357 = vmatpush1.msra.mxu0 0.0
    %358 = vmatprep.subr.mxu0 0.0
    %359 = vmatpush1.msra.mxu0 0.0
    %360 = vmatprep.subr.mxu0 0.0
    %361 = vmatpush1.msra.mxu0 0.0
    %362 = vmatprep.subr.mxu0 0.0
    %363 = vmatpush1.msra.mxu0 0.0
    %364 = vmatprep.subr.mxu0 0.0
    %365 = vmatpush1.msra.mxu0 0.0
    %366 = vmatprep.subr.mxu0 0.0
    %367 = vmatpush1.msra.mxu0 0.0
    %368 = vmatprep.mubr.f32.mxu0 0.0
    %369 = vmatmul.mubr.f32.gmra.mrb[0].mxu0 %v299
    %v370 = vpop.f32.mrb[0].mxu0
    %v371 = vadd.f32 %v296, %v370
    %v372 = vpop.f32.mrb[0].mxu0
    %373 = vmatprep.mubr.f32.mxu0 0.0
    %374 = vmatmul.mubr.f32.gmra.mrb[0].mxu0 %v302
    %v375 = vpop.f32.mrb[0].mxu0
    %v376 = vadd.f32 %v296, %v375
    %v377 = vpop.f32.mrb[0].mxu0
    %378 = vdwg.mxu0
    %v379 = vmax.f32 %v371, 0.0
    %v380 = vmax.f32 %v376, 0.0
    %381 = vst.msk [vmem:[#allocation13] sm:$0xff] %vm182, %v379
    %382 = vst.msk [vmem:[#allocation13 + $0x8] sm:$0xff] %vm182, %v380
    // Predicated region
    $region42: #{attention_encoder.1} parent=1 // pred_check
      _
    $region43: #{attention_encoder.1} parent=1 // pred_check_branch
      %384 = sbr.rel (0) target = $region45
    $region44: #{attention_encoder.1} parent=1 // pred_region
      %s386 = ssub.s32 256, 256
      %387 = vsyncadd [#allocation4], %s386
      %s388 = sshll.u32 [#allocation10], 4
      %s389 = int_to_ptr.vmem [resolvable:$true] %s388
      %394 = dma.vmem_to_hbm [thread:$0]  %s389, 256, %s6, [#allocation4], 128, 128, 8
    $region45: #{attention_encoder.1} parent=1 // pred_fallthru
      _
    // Predicated region
    $region46: #{attention_encoder.1} parent=1 // pred_check
      _
    $region47: #{attention_encoder.1} parent=1 // pred_check_branch
      %396 = sbr.rel (0) target = $region49
    $region48: #{attention_encoder.1} parent=1 // pred_region
      %s398 = ssub.s32 256, 256
      %399 = vsyncadd [#allocation12], %s398
      %s400 = sshll.u32 [#allocation11], 4
      %s401 = int_to_ptr.vmem [resolvable:$true] %s400
      %406 = dma.vmem_to_hbm [thread:$0]  %s401, 256, %s7, [#allocation12], 128, 128, 8
    $region49: #{attention_encoder.1} parent=1 // pred_fallthru
      _
    // Predicated region
    $region50: #{attention_encoder.1} parent=1 // pred_check
      _
    $region51: #{attention_encoder.1} parent=1 // pred_check_branch
      %408 = sbr.rel (0) target = $region53
    $region52: #{attention_encoder.1} parent=1 // pred_region
      %s410 = ssub.s32 256, 256
      %411 = vsyncadd [#allocation12], %s410
      %s412 = sshll.u32 [#allocation13], 4
      %s413 = int_to_ptr.vmem [resolvable:$true] %s412
      %418 = dma.vmem_to_hbm [thread:$0]  %s413, 256, %s8, [#allocation12], 128, 128, 8
    $region53: #{attention_encoder.1} parent=1 // pred_fallthru
      _
    // Predicated region
    $region54: #{attention_encoder.1} parent=1 // pred_check
      _
    $region55: #{attention_encoder.1} parent=1 // pred_check_branch
      %420 = sbr.rel (0) target = $region57
    $region56: #{attention_encoder.1} parent=1 // pred_region
      %421 = dma.done [#allocation4], 256
    $region57: #{attention_encoder.1} parent=1 // pred_fallthru
      _
    // Predicated region
    $region58: #{attention_encoder.1} parent=1 // pred_check
      _
    $region59: #{attention_encoder.1} parent=1 // pred_check_branch
      %423 = sbr.rel (0) target = $region61
    $region60: #{attention_encoder.1} parent=1 // pred_region
      %424 = dma.done [#allocation12], 256
    $region61: #{attention_encoder.1} parent=1 // pred_fallthru
      _
    // Predicated region
    $region62: #{attention_encoder.1} parent=1 // pred_check
      _
    $region63: #{attention_encoder.1} parent=1 // pred_check_branch
      %426 = sbr.rel (0) target = $region65
    $region64: #{attention_encoder.1} parent=1 // pred_region
      %427 = dma.done [#allocation12], 256
    $region65: #{attention_encoder.1} parent=1 // pred_fallthru
      _
    %428 = vsyncpa [#allocation3], 1
    %429 = vsyncpa [#allocation6], 1
    %430 = vsyncpa [#allocation9], 1
    %431 = vsyncpa [#allocation4], 1
    %432 = vsyncpa [#allocation12], 1

</llo_original>
